<compile_context>
chip_gen: v7x
topology: tpu7x:2x2x1
jax: 0.10.0
libtpu: 0.0.40
codegen_flags: <defaults>
</compile_context>

<pallas_src>
import math

import jax
import jax.numpy as jnp
from jax.experimental import pallas as pl
from jax.experimental.pallas import tpu as pltpu


# --------------------------------------------------------------------------
# Pallas kernel: fused CoordAtt forward for one batch element, (C, HW) layout.
# --------------------------------------------------------------------------
def _coord_att_kernel(x_ref, p_ref, w1_ref, b1_ref, wex_ref, bh_ref, bw_ref,
                      bch_ref, bcw_ref, o_ref):
    """x_ref : (C, HW)   input-dtype, lane-dense
       p_ref : (HW, H+W) 0/1 pooling-selection matrix (input dtype)
       w1_ref: (mip, C)  squeeze conv with eval-mode BN folded in (f32)
       b1_ref: (mip, 1)  folded bias (f32)
       wex_ref: (2C, mip) stacked [conv_h ; conv_w] weights (f32)
       bh_ref / bw_ref: (C, 1) excitation biases (f32)
       bch_ref: (H, HW)  0/1 broadcast matrix for a_h (input dtype)
       bcw_ref: (W, HW)  0/1 broadcast matrix for a_w (input dtype)
       o_ref : (C, HW)
    """
    C, HW = x_ref.shape
    H = bch_ref.shape[0]
    W = bcw_ref.shape[0]
    dt = x_ref.dtype

    x = x_ref[...]                                           # (C, HW), no f32 cast

    # ---- coordinate pooling as one (C,HW)@(HW,H+W) matmul, f32 accumulation ----
    pooled = jnp.dot(x, p_ref[...], preferred_element_type=jnp.float32)   # (C, H+W)
    pos = jax.lax.broadcasted_iota(jnp.int32, (1, H + W), 1)
    pooled = pooled * jnp.where(pos < H, 1.0 / W, 1.0 / H)   # sums -> means

    # ---- shared squeeze conv (+ folded eval-mode BN) + h_swish ----------------
    y = jnp.dot(w1_ref[...], pooled, preferred_element_type=jnp.float32) \
        + b1_ref[...]                                        # (mip, H+W)
    y = y * (jnp.clip(y + 3.0, 0.0, 6.0) * (1.0 / 6.0))      # h_swish

    # ---- both excitation convs in one stacked matmul, split + sigmoid ---------
    a = jnp.dot(wex_ref[...], y, preferred_element_type=jnp.float32)      # (2C, H+W)
    a_h = jax.nn.sigmoid(a[:C, :H] + bh_ref[...]).astype(dt)              # (C, H)
    a_w = jax.nn.sigmoid(a[C:, H:] + bw_ref[...]).astype(dt)              # (C, W)

    # ---- broadcast gates back to (C, HW) via 0/1 matmuls (no relayout) --------
    g_h = jnp.dot(a_h, bch_ref[...], preferred_element_type=dt)           # (C, HW)
    g_w = jnp.dot(a_w, bcw_ref[...], preferred_element_type=dt)           # (C, HW)

    o_ref[...] = x * g_h * g_w                               # identity * a_h * a_w


# --------------------------------------------------------------------------
# Wrapper (pallas_call plumbing)
# --------------------------------------------------------------------------
def coord_att(x, params):
    N, C, H, W = x.shape
    HW = H * W
    mip = params["w1"].shape[0]
    assert params["wex"].shape == (2 * C, mip), "CoordAtt gating requires oup == inp"
    dt = x.dtype

    # Small constant selection matrices (exact 0/1 entries in the input dtype).
    row = jnp.arange(HW, dtype=jnp.int32) // W               # h index of each flat pos
    col = jnp.arange(HW, dtype=jnp.int32) % W                # w index of each flat pos
    pool_mat = jnp.concatenate(
        [(row[:, None] == jnp.arange(H, dtype=jnp.int32)[None, :]),
         (col[:, None] == jnp.arange(W, dtype=jnp.int32)[None, :])],
        axis=1).astype(dt)                                   # (HW, H+W)
    bcast_h = (jnp.arange(H, dtype=jnp.int32)[:, None] == row[None, :]).astype(dt)
    bcast_w = (jnp.arange(W, dtype=jnp.int32)[:, None] == col[None, :]).astype(dt)

    # Lane-dense view: (N, C, H*W).  Metadata-only reshape for contiguous NCHW.
    x_flat = x.reshape(N, C, HW)

    # ---- generation-aware VMEM budget -----------------------------------------
    itemsize = jnp.dtype(dt).itemsize
    blk_bytes = C * HW * itemsize
    param_bytes = sum(int(p.size) * int(jnp.dtype(p.dtype).itemsize)
                      for p in (pool_mat, bcast_h, bcast_w, params["w1"],
                                params["b1"], params["wex"], params["bh"],
                                params["bw"]))
    # in + out blocks double-buffered, two full-size gate intermediates, params, margin.
    needed = 4 * blk_bytes + 2 * C * HW * itemsize + 2 * param_bytes + (2 << 20)
    try:
        vmem_cap = int(pltpu.get_tpu_info().vmem_capacity_bytes)
    except Exception:
        vmem_cap = 64 << 20                                  # v7x per-TC worst case
    vmem_limit = int(min(max(needed, 32 << 20), 0.75 * vmem_cap))
    # TODO(synk): when `needed` exceeds the budget (large C*H*W, e.g. C>=256 at
    # 56x56), split into a pooling/gate pass plus a spatially tiled lane-dense
    # gating pass (grid (N, HW//tile)); also gives >=2 parallel work items for
    # N==1 inference on v7x's two TensorCores.

    out_flat = pl.pallas_call(
        _coord_att_kernel,
        out_shape=jax.ShapeDtypeStruct((N, C, HW), dt),
        grid=(N,),
        in_specs=[
            pl.BlockSpec((None, C, HW), lambda n: (n, 0, 0)),     # x (batch squeezed)
            pl.BlockSpec((HW, H + W), lambda n: (0, 0)),          # pooling matrix
            pl.BlockSpec((mip, C), lambda n: (0, 0)),             # w1 (BN folded)
            pl.BlockSpec((mip, 1), lambda n: (0, 0)),             # b1
            pl.BlockSpec((2 * C, mip), lambda n: (0, 0)),         # [wh ; ww]
            pl.BlockSpec((C, 1), lambda n: (0, 0)),               # bh
            pl.BlockSpec((C, 1), lambda n: (0, 0)),               # bw
            pl.BlockSpec((H, HW), lambda n: (0, 0)),              # broadcast_h
            pl.BlockSpec((W, HW), lambda n: (0, 0)),              # broadcast_w
        ],
        out_specs=pl.BlockSpec((None, C, HW), lambda n: (n, 0, 0)),
        compiler_params=pltpu.CompilerParams(
            dimension_semantics=("parallel",),
            vmem_limit_bytes=vmem_limit),
    )(x_flat, pool_mat, params["w1"], params["b1"], params["wex"],
      params["bh"], params["bw"], bcast_h, bcast_w)

    return out_flat.reshape(N, C, H, W)


# --------------------------------------------------------------------------
# Parameter construction (mirrors CoordAtt.__init__)
# --------------------------------------------------------------------------
def make_coordatt_params(key, inp, oup, reduction=32, eps=1e-5):
    assert inp == oup, "broadcast gating in CoordAtt.forward requires oup == inp"
    mip = max(8, inp // reduction)
    k1, k2, k3, k4, k5, k6 = jax.random.split(key, 6)

    def conv_init(kw, kb, cout, cin):
        # PyTorch Conv2d(kernel_size=1) default init bounds.
        bound = 1.0 / math.sqrt(cin)
        w = jax.random.uniform(kw, (cout, cin), jnp.float32, -bound, bound)
        b = jax.random.uniform(kb, (cout, 1), jnp.float32, -bound, bound)
        return w, b

    w1, b1 = conv_init(k1, k2, mip, inp)
    wh, bh = conv_init(k3, k4, oup, mip)
    ww, bw = conv_init(k5, k6, oup, mip)

    # Fold inference-mode BatchNorm (gamma=1, beta=0, mean=0, var=1) into conv1.
    s = 1.0 / math.sqrt(1.0 + eps)
    return {
        "w1": w1 * s, "b1": b1 * s,
        "wh": wh, "bh": bh, "ww": ww, "bw": bw,
        "wex": jnp.concatenate([wh, ww], axis=0),            # stacked excitation
    }


# --------------------------------------------------------------------------
# Pure-JAX reference (for correctness check)
# --------------------------------------------------------------------------
def coord_att_ref(x, params):
    x_h = jnp.mean(x, axis=3)                                # (N, C, H)
    x_w = jnp.mean(x, axis=2)                                # (N, C, W)

    def squeeze(p):
        y = jnp.einsum("mc,ncl->nml", params["w1"], p) + params["b1"][None]
        return y * (jnp.clip(y + 3.0, 0.0, 6.0) / 6.0)

    y_h, y_w = squeeze(x_h), squeeze(x_w)
    a_h = jax.nn.sigmoid(
        jnp.einsum("om,nml->nol", params["wh"], y_h) + params["bh"][None])
    a_w = jax.nn.sigmoid(
        jnp.einsum("om,nml->nol", params["ww"], y_w) + params["bw"][None])
    return x * a_h[:, :, :, None] * a_w[:, :, None, :]


# --------------------------------------------------------------------------
if __name__ == "__main__":
    key = jax.random.PRNGKey(0)
    k_x, k_p = jax.random.split(key)

    N, C, H, W = 2, 4, 16, 16
    x = jax.random.normal(k_x, (N, C, H, W), jnp.float32)
    params = make_coordatt_params(k_p, inp=C, oup=C, reduction=32)

    out = coord_att(x, params)
    jax.block_until_ready(out)

    assert out.shape == (N, C, H, W), out.shape
    ref = coord_att_ref(x, params)
    assert jnp.allclose(out, ref, atol=2e-5, rtol=2e-5), \
        float(jnp.max(jnp.abs(out - ref)))
    print("KERNEL_OK")
</pallas_src>

<mosaic_0001>
module attributes {stable_mosaic.version = 11 : i64} {
  func.func @_coord_att_kernel(%arg0: i32, %arg1: memref<1x4x256xf32, #tpu.memory_space<vmem>>, %arg2: memref<256x32xf32, #tpu.memory_space<vmem>>, %arg3: memref<8x4xf32, #tpu.memory_space<vmem>>, %arg4: memref<8x1xf32, #tpu.memory_space<vmem>>, %arg5: memref<8x8xf32, #tpu.memory_space<vmem>>, %arg6: memref<4x1xf32, #tpu.memory_space<vmem>>, %arg7: memref<4x1xf32, #tpu.memory_space<vmem>>, %arg8: memref<16x256xf32, #tpu.memory_space<vmem>>, %arg9: memref<16x256xf32, #tpu.memory_space<vmem>>, %arg10: memref<1x4x256xf32, #tpu.memory_space<vmem>>) attributes {dimension_semantics = [#tpu.dimension_semantics<parallel>], iteration_bounds = array<i64: 2>, scalar_prefetch = 0 : i64, scratch_operands = 0 : i64, tpu.core_type = #tpu.core_type<tc>, window_params = [{transform_indices = @transform_0, window_bounds = array<i64: 1, 4, 256>}, {pipeline_mode = #tpu.pipeline_mode<synchronous>, transform_indices = @transform_1, window_bounds = array<i64: 256, 32>}, {pipeline_mode = #tpu.pipeline_mode<synchronous>, transform_indices = @transform_2, window_bounds = array<i64: 8, 4>}, {pipeline_mode = #tpu.pipeline_mode<synchronous>, transform_indices = @transform_3, window_bounds = array<i64: 8, 1>}, {pipeline_mode = #tpu.pipeline_mode<synchronous>, transform_indices = @transform_4, window_bounds = array<i64: 8, 8>}, {pipeline_mode = #tpu.pipeline_mode<synchronous>, transform_indices = @transform_5, window_bounds = array<i64: 4, 1>}, {pipeline_mode = #tpu.pipeline_mode<synchronous>, transform_indices = @transform_6, window_bounds = array<i64: 4, 1>}, {pipeline_mode = #tpu.pipeline_mode<synchronous>, transform_indices = @transform_7, window_bounds = array<i64: 16, 256>}, {pipeline_mode = #tpu.pipeline_mode<synchronous>, transform_indices = @transform_8, window_bounds = array<i64: 16, 256>}, {transform_indices = @transform_9, window_bounds = array<i64: 1, 4, 256>}]} {
    %c0 = arith.constant 0 : index
    %c0_0 = arith.constant 0 : index
    %c0_1 = arith.constant 0 : index
    %0 = vector.load %arg1[%c0, %c0_0, %c0_1] : memref<1x4x256xf32, #tpu.memory_space<vmem>>, vector<1x4x256xf32>
    %1 = vector.shape_cast %0 : vector<1x4x256xf32> to vector<4x256xf32>
    %c0_2 = arith.constant 0 : index
    %c0_3 = arith.constant 0 : index
    %2 = vector.load %arg2[%c0_2, %c0_3] : memref<256x32xf32, #tpu.memory_space<vmem>>, vector<256x32xf32>
    %cst = arith.constant dense<0.000000e+00> : vector<4x32xf32>
    %3 = tpu.matmul %1, %2, %cst {dimension_numbers = #tpu.dot_dimension_numbers<[1], [0], [0], [1], [0, 0, 1, 1], [], []>} : vector<4x256xf32>, vector<256x32xf32>, vector<4x32xf32> -> vector<4x32xf32>
    %4 = tpu.iota {dimensions = array<i32: 1>} : vector<1x32xi32>
    %c16_i32 = arith.constant 16 : i32
    %5 = vector.broadcast %c16_i32 : i32 to vector<1x32xi32>
    %6 = arith.cmpi slt, %4, %5 : vector<1x32xi32>
    %cst_4 = arith.constant 6.250000e-02 : f32
    %cst_5 = arith.constant 6.250000e-02 : f32
    %7 = vector.broadcast %cst_4 : f32 to vector<1x32xf32>
    %8 = vector.broadcast %cst_5 : f32 to vector<1x32xf32>
    %9 = arith.select %6, %7, %8 : vector<1x32xi1>, vector<1x32xf32>
    %10 = vector.broadcast %9 : vector<1x32xf32> to vector<4x32xf32>
    %11 = arith.mulf %3, %10 : vector<4x32xf32>
    %c0_6 = arith.constant 0 : index
    %c0_7 = arith.constant 0 : index
    %12 = vector.load %arg3[%c0_6, %c0_7] : memref<8x4xf32, #tpu.memory_space<vmem>>, vector<8x4xf32>
    %cst_8 = arith.constant dense<0.000000e+00> : vector<8x32xf32>
    %13 = tpu.matmul %12, %11, %cst_8 {dimension_numbers = #tpu.dot_dimension_numbers<[1], [0], [0], [1], [0, 0, 1, 1], [], []>} : vector<8x4xf32>, vector<4x32xf32>, vector<8x32xf32> -> vector<8x32xf32>
    %c0_9 = arith.constant 0 : index
    %c0_10 = arith.constant 0 : index
    %14 = vector.load %arg4[%c0_9, %c0_10] : memref<8x1xf32, #tpu.memory_space<vmem>>, vector<8x1xf32>
    %15 = vector.broadcast %14 : vector<8x1xf32> to vector<8x32xf32>
    %16 = arith.addf %13, %15 : vector<8x32xf32>
    %cst_11 = arith.constant 3.000000e+00 : f32
    %17 = vector.broadcast %cst_11 : f32 to vector<8x32xf32>
    %18 = arith.addf %16, %17 : vector<8x32xf32>
    %cst_12 = arith.constant 0.000000e+00 : f32
    %cst_13 = arith.constant 6.000000e+00 : f32
    %19 = vector.broadcast %cst_12 : f32 to vector<8x32xf32>
    %20 = arith.maximumf %19, %18 : vector<8x32xf32>
    %21 = vector.broadcast %cst_13 : f32 to vector<8x32xf32>
    %22 = arith.minimumf %21, %20 : vector<8x32xf32>
    %cst_14 = arith.constant 0.166666672 : f32
    %23 = vector.broadcast %cst_14 : f32 to vector<8x32xf32>
    %24 = arith.mulf %22, %23 : vector<8x32xf32>
    %25 = arith.mulf %16, %24 : vector<8x32xf32>
    %c0_15 = arith.constant 0 : index
    %c0_16 = arith.constant 0 : index
    %26 = vector.load %arg5[%c0_15, %c0_16] : memref<8x8xf32, #tpu.memory_space<vmem>>, vector<8x8xf32>
    %cst_17 = arith.constant dense<0.000000e+00> : vector<8x32xf32>
    %27 = tpu.matmul %26, %25, %cst_17 {dimension_numbers = #tpu.dot_dimension_numbers<[1], [0], [0], [1], [0, 0, 1, 1], [], []>} : vector<8x8xf32>, vector<8x32xf32>, vector<8x32xf32> -> vector<8x32xf32>
    %28 = vector.extract_strided_slice %27 {offsets = [0, 0], sizes = [4, 16], strides = [1, 1]} : vector<8x32xf32> to vector<4x16xf32>
    %c0_18 = arith.constant 0 : index
    %c0_19 = arith.constant 0 : index
    %29 = vector.load %arg6[%c0_18, %c0_19] : memref<4x1xf32, #tpu.memory_space<vmem>>, vector<4x1xf32>
    %30 = vector.broadcast %29 : vector<4x1xf32> to vector<4x16xf32>
    %31 = arith.addf %28, %30 : vector<4x16xf32>
    %32 = arith.negf %31 : vector<4x16xf32>
    %33 = math.exp %32 : vector<4x16xf32>
    %cst_20 = arith.constant 1.000000e+00 : f32
    %34 = vector.broadcast %cst_20 : f32 to vector<4x16xf32>
    %35 = arith.addf %34, %33 : vector<4x16xf32>
    %36 = arith.divf %34, %35 : vector<4x16xf32>
    %37 = vector.extract_strided_slice %27 {offsets = [4, 16], sizes = [4, 16], strides = [1, 1]} : vector<8x32xf32> to vector<4x16xf32>
    %c0_21 = arith.constant 0 : index
    %c0_22 = arith.constant 0 : index
    %38 = vector.load %arg7[%c0_21, %c0_22] : memref<4x1xf32, #tpu.memory_space<vmem>>, vector<4x1xf32>
    %39 = vector.broadcast %38 : vector<4x1xf32> to vector<4x16xf32>
    %40 = arith.addf %37, %39 : vector<4x16xf32>
    %41 = arith.negf %40 : vector<4x16xf32>
    %42 = math.exp %41 : vector<4x16xf32>
    %cst_23 = arith.constant 1.000000e+00 : f32
    %43 = vector.broadcast %cst_23 : f32 to vector<4x16xf32>
    %44 = arith.addf %43, %42 : vector<4x16xf32>
    %45 = arith.divf %43, %44 : vector<4x16xf32>
    %c0_24 = arith.constant 0 : index
    %c0_25 = arith.constant 0 : index
    %46 = vector.load %arg8[%c0_24, %c0_25] : memref<16x256xf32, #tpu.memory_space<vmem>>, vector<16x256xf32>
    %cst_26 = arith.constant dense<0.000000e+00> : vector<4x256xf32>
    %47 = tpu.matmul %36, %46, %cst_26 {dimension_numbers = #tpu.dot_dimension_numbers<[1], [0], [0], [1], [0, 0, 1, 1], [], []>} : vector<4x16xf32>, vector<16x256xf32>, vector<4x256xf32> -> vector<4x256xf32>
    %c0_27 = arith.constant 0 : index
    %c0_28 = arith.constant 0 : index
    %48 = vector.load %arg9[%c0_27, %c0_28] : memref<16x256xf32, #tpu.memory_space<vmem>>, vector<16x256xf32>
    %cst_29 = arith.constant dense<0.000000e+00> : vector<4x256xf32>
    %49 = tpu.matmul %45, %48, %cst_29 {dimension_numbers = #tpu.dot_dimension_numbers<[1], [0], [0], [1], [0, 0, 1, 1], [], []>} : vector<4x16xf32>, vector<16x256xf32>, vector<4x256xf32> -> vector<4x256xf32>
    %50 = arith.mulf %1, %47 : vector<4x256xf32>
    %51 = arith.mulf %50, %49 : vector<4x256xf32>
    %c0_30 = arith.constant 0 : index
    %c0_31 = arith.constant 0 : index
    %c0_32 = arith.constant 0 : index
    %52 = vector.load %arg10[%c0_30, %c0_31, %c0_32] : memref<1x4x256xf32, #tpu.memory_space<vmem>>, vector<1x4x256xf32>
    %53 = vector.shape_cast %52 : vector<1x4x256xf32> to vector<4x256xf32>
    %54 = vector.shape_cast %51 : vector<4x256xf32> to vector<1x4x256xf32>
    tpu.vector_store %arg10[%c0_30, %c0_31, %c0_32], %54 {strides = array<i32>} : memref<1x4x256xf32, #tpu.memory_space<vmem>>, vector<1x4x256xf32>,
    return
  }
  func.func @transform_0(%arg0: i32) -> (i32, i32, i32) {
    %c0_i32 = arith.constant 0 : i32
    %c0_i32_0 = arith.constant 0 : i32
    %c0_i32_1 = arith.constant 0 : i32
    return %arg0, %c0_i32, %c0_i32_0 : i32, i32, i32
  }
  func.func @transform_1(%arg0: i32) -> (i32, i32) {
    %c0_i32 = arith.constant 0 : i32
    %c0_i32_0 = arith.constant 0 : i32
    %c0_i32_1 = arith.constant 0 : i32
    return %c0_i32, %c0_i32_0 : i32, i32
  }
  func.func @transform_2(%arg0: i32) -> (i32, i32) {
    %c0_i32 = arith.constant 0 : i32
    %c0_i32_0 = arith.constant 0 : i32
    %c0_i32_1 = arith.constant 0 : i32
    return %c0_i32, %c0_i32_0 : i32, i32
  }
  func.func @transform_3(%arg0: i32) -> (i32, i32) {
    %c0_i32 = arith.constant 0 : i32
    %c0_i32_0 = arith.constant 0 : i32
    %c0_i32_1 = arith.constant 0 : i32
    return %c0_i32, %c0_i32_0 : i32, i32
  }
  func.func @transform_4(%arg0: i32) -> (i32, i32) {
    %c0_i32 = arith.constant 0 : i32
    %c0_i32_0 = arith.constant 0 : i32
    %c0_i32_1 = arith.constant 0 : i32
    return %c0_i32, %c0_i32_0 : i32, i32
  }
  func.func @transform_5(%arg0: i32) -> (i32, i32) {
    %c0_i32 = arith.constant 0 : i32
    %c0_i32_0 = arith.constant 0 : i32
    %c0_i32_1 = arith.constant 0 : i32
    return %c0_i32, %c0_i32_0 : i32, i32
  }
  func.func @transform_6(%arg0: i32) -> (i32, i32) {
    %c0_i32 = arith.constant 0 : i32
    %c0_i32_0 = arith.constant 0 : i32
    %c0_i32_1 = arith.constant 0 : i32
    return %c0_i32, %c0_i32_0 : i32, i32
  }
  func.func @transform_7(%arg0: i32) -> (i32, i32) {
    %c0_i32 = arith.constant 0 : i32
    %c0_i32_0 = arith.constant 0 : i32
    %c0_i32_1 = arith.constant 0 : i32
    return %c0_i32, %c0_i32_0 : i32, i32
  }
  func.func @transform_8(%arg0: i32) -> (i32, i32) {
    %c0_i32 = arith.constant 0 : i32
    %c0_i32_0 = arith.constant 0 : i32
    %c0_i32_1 = arith.constant 0 : i32
    return %c0_i32, %c0_i32_0 : i32, i32
  }
  func.func @transform_9(%arg0: i32) -> (i32, i32, i32) {
    %c0_i32 = arith.constant 0 : i32
    %c0_i32_0 = arith.constant 0 : i32
    %c0_i32_1 = arith.constant 0 : i32
    return %arg0, %c0_i32, %c0_i32_0 : i32, i32, i32
  }
}

</mosaic_0001>

<llo_original>
// kernel: tpu_custom_call.1
$region0: #{tpu_custom_call.1}
  #allocation0 [shape = 'u32[]', space=smem, size = 0x4, offset = 0x4, fixed_abs, tag = 'smem constant byte address 0x4 - core index']
  #allocation1 [shape = 'u32[144,128]{1,0:T(1,128)}', space=vmem, size = 0x12000, scoped, tag = 'internal scratch']
  %s0 = inlined_call_operand.vmem [shape: f32[2,4,256], index: 0, kind: input, shape index: {}]
  %s1 = inlined_call_operand.vmem [shape: f32[256,32], index: 1, kind: input, shape index: {}]
  %s2 = inlined_call_operand.vmem [shape: f32[8,4], index: 2, kind: input, shape index: {}]
  %s3 = inlined_call_operand.vmem [shape: f32[8,1], index: 3, kind: input, shape index: {}]
  %s4 = inlined_call_operand.vmem [shape: f32[8,8], index: 4, kind: input, shape index: {}]
  %s5 = inlined_call_operand.vmem [shape: f32[4,1], index: 5, kind: input, shape index: {}]
  %s6 = inlined_call_operand.vmem [shape: f32[4,1], index: 6, kind: input, shape index: {}]
  %s7 = inlined_call_operand.vmem [shape: f32[16,256], index: 7, kind: input, shape index: {}]
  %s8 = inlined_call_operand.vmem [shape: f32[16,256], index: 8, kind: input, shape index: {}]
  %s9 = inlined_call_operand.hbm [shape: f32[2,4,256], index: 9, kind: output, shape index: {}]
  %s10 = sld [smem:[#allocation0]]
  $region69: #{tpu_custom_call.1} parent=0
    _
  %s12 = ssub.s32 1, %s10
  %s13 = scalar_select 0, %s12, %s10
  $region1: #{tpu_custom_call.1} parent=0
    #allocation2 [shape = 'u8[8192]{0}', space=vmem, size = 0x2000, scoped, tag = 'output window, operand 0']
    #allocation3 [shape = 's32[2]{0}', space=sflag, size = 0x8, scoped, tag = 'scoped memory for tpu_custom_call.1']
    %14 = vsyncpa [#allocation3], 0
    %s15 = scalar_lea.sflag [#allocation3], 1
    %16 = vsyncpa %s15, 0
    loop: start=0, step=1, limit=4
    $region2: #{tpu_custom_call.1} parent=1 // loop_pre_header
      _
    $region3: #{tpu_custom_call.1} parent=1 // loop_header
      %s18 = sphi 0, %s22
      %p19 = scmp.ge.s32.totalorder %s18, 4
      %s28 = sphi 0, %s30
      %s31 = sphi 0, %s28
      %s32 = sphi 0, %s31
      %s48 = sphi 0, %s32
      %s52 = sphi 0, %s52
      %s54 = sphi 0, %s52
      %s55 = sphi 0, %s54
      %s69 = sphi 0, %s55
      %s73 = sphi 0, %s73
      %s75 = sphi 0, %s73
      %s76 = sphi 0, %s75
      %s90 = sphi 0, %s76
      %s94 = sphi 0, %s94
      %s96 = sphi 0, %s94
      %s97 = sphi 0, %s96
      %s111 = sphi 0, %s97
      %s115 = sphi 0, %s115
      %s117 = sphi 0, %s115
      %s118 = sphi 0, %s117
      %s132 = sphi 0, %s118
      %s136 = sphi 0, %s136
      %s138 = sphi 0, %s136
      %s139 = sphi 0, %s138
      %s153 = sphi 0, %s139
      %s157 = sphi 0, %s157
      %s159 = sphi 0, %s157
      %s160 = sphi 0, %s159
      %s174 = sphi 0, %s160
      %s178 = sphi 0, %s178
      %s180 = sphi 0, %s178
      %s181 = sphi 0, %s180
      %s195 = sphi 0, %s181
      %s199 = sphi 0, %s199
      %s201 = sphi 0, %s199
      %s202 = sphi 0, %s201
      %s216 = sphi 0, %s202
      %s222 = sphi 0, %s224
      %s225 = sphi 0, %s222
      %s226 = sphi 0, %s225
      %s242 = sphi 0, %s226
    $region4: #{tpu_custom_call.1} parent=1 // loop_header_branch
      %21 = sbr.rel (%p19) target = $region8
    $region5: #{tpu_custom_call.1} parent=1 // loop_body
      %s23 = ssub.s32 %s18, 1
      %s24 = ssub.s32 %s18, 2
      %s25 = sadd.s32 %s18, 1
      %s26 = ssub.s32 %s18, %s25
      %p27 = scmp.eq.s32.totalorder %s26, 0
      %s29 = sadd.s32 %s28, 1
      %s30 = scalar_select %p27, %s28, %s29
      %p33 = pneg %p27
      %p34 = scmp.eq.s32.totalorder %s18, 1
      %p35 = por %p33, %p34
      %p36 = scmp.ne.s32.totalorder %s28, %s31
      %p37 = scmp.eq.s32.totalorder %s18, 0
      %p38 = por %p36, %p37
      %p39 = scmp.ne.s32.totalorder %s28, %s31
      %p40 = scmp.eq.s32.totalorder %s23, 1
      %p41 = por %p39, %p40
      %p42 = scmp.ne.s32.totalorder %s31, %s32
      %p43 = scmp.eq.s32.totalorder %s23, 0
      %p44 = por %p42, %p43
      %p45 = scmp.ne.s32.totalorder %s31, %s32
      %p46 = scmp.eq.s32.totalorder %s24, 1
      %p47 = por %p45, %p46
      %p49 = scmp.ne.s32.totalorder %s32, %s48
      %p50 = scmp.eq.s32.totalorder %s24, 0
      %p51 = por %p49, %p50
      %s53 = sadd.s32 %s52, 1
      %p56 = scmp.eq.s32.totalorder %s18, 1
      %p57 = scmp.ne.s32.totalorder %s52, %s54
      %p58 = scmp.eq.s32.totalorder %s18, 0
      %p59 = por %p57, %p58
      %p60 = scmp.ne.s32.totalorder %s52, %s54
      %p61 = scmp.eq.s32.totalorder %s23, 1
      %p62 = por %p60, %p61
      %p63 = scmp.ne.s32.totalorder %s54, %s55
      %p64 = scmp.eq.s32.totalorder %s23, 0
      %p65 = por %p63, %p64
      %p66 = scmp.ne.s32.totalorder %s54, %s55
      %p67 = scmp.eq.s32.totalorder %s24, 1
      %p68 = por %p66, %p67
      %p70 = scmp.ne.s32.totalorder %s55, %s69
      %p71 = scmp.eq.s32.totalorder %s24, 0
      %p72 = por %p70, %p71
      %s74 = sadd.s32 %s73, 1
      %p77 = scmp.eq.s32.totalorder %s18, 1
      %p78 = scmp.ne.s32.totalorder %s73, %s75
      %p79 = scmp.eq.s32.totalorder %s18, 0
      %p80 = por %p78, %p79
      %p81 = scmp.ne.s32.totalorder %s73, %s75
      %p82 = scmp.eq.s32.totalorder %s23, 1
      %p83 = por %p81, %p82
      %p84 = scmp.ne.s32.totalorder %s75, %s76
      %p85 = scmp.eq.s32.totalorder %s23, 0
      %p86 = por %p84, %p85
      %p87 = scmp.ne.s32.totalorder %s75, %s76
      %p88 = scmp.eq.s32.totalorder %s24, 1
      %p89 = por %p87, %p88
      %p91 = scmp.ne.s32.totalorder %s76, %s90
      %p92 = scmp.eq.s32.totalorder %s24, 0
      %p93 = por %p91, %p92
      %s95 = sadd.s32 %s94, 1
      %p98 = scmp.eq.s32.totalorder %s18, 1
      %p99 = scmp.ne.s32.totalorder %s94, %s96
      %p100 = scmp.eq.s32.totalorder %s18, 0
      %p101 = por %p99, %p100
      %p102 = scmp.ne.s32.totalorder %s94, %s96
      %p103 = scmp.eq.s32.totalorder %s23, 1
      %p104 = por %p102, %p103
      %p105 = scmp.ne.s32.totalorder %s96, %s97
      %p106 = scmp.eq.s32.totalorder %s23, 0
      %p107 = por %p105, %p106
      %p108 = scmp.ne.s32.totalorder %s96, %s97
      %p109 = scmp.eq.s32.totalorder %s24, 1
      %p110 = por %p108, %p109
      %p112 = scmp.ne.s32.totalorder %s97, %s111
      %p113 = scmp.eq.s32.totalorder %s24, 0
      %p114 = por %p112, %p113
      %s116 = sadd.s32 %s115, 1
      %p119 = scmp.eq.s32.totalorder %s18, 1
      %p120 = scmp.ne.s32.totalorder %s115, %s117
      %p121 = scmp.eq.s32.totalorder %s18, 0
      %p122 = por %p120, %p121
      %p123 = scmp.ne.s32.totalorder %s115, %s117
      %p124 = scmp.eq.s32.totalorder %s23, 1
      %p125 = por %p123, %p124
      %p126 = scmp.ne.s32.totalorder %s117, %s118
      %p127 = scmp.eq.s32.totalorder %s23, 0
      %p128 = por %p126, %p127
      %p129 = scmp.ne.s32.totalorder %s117, %s118
      %p130 = scmp.eq.s32.totalorder %s24, 1
      %p131 = por %p129, %p130
      %p133 = scmp.ne.s32.totalorder %s118, %s132
      %p134 = scmp.eq.s32.totalorder %s24, 0
      %p135 = por %p133, %p134
      %s137 = sadd.s32 %s136, 1
      %p140 = scmp.eq.s32.totalorder %s18, 1
      %p141 = scmp.ne.s32.totalorder %s136, %s138
      %p142 = scmp.eq.s32.totalorder %s18, 0
      %p143 = por %p141, %p142
      %p144 = scmp.ne.s32.totalorder %s136, %s138
      %p145 = scmp.eq.s32.totalorder %s23, 1
      %p146 = por %p144, %p145
      %p147 = scmp.ne.s32.totalorder %s138, %s139
      %p148 = scmp.eq.s32.totalorder %s23, 0
      %p149 = por %p147, %p148
      %p150 = scmp.ne.s32.totalorder %s138, %s139
      %p151 = scmp.eq.s32.totalorder %s24, 1
      %p152 = por %p150, %p151
      %p154 = scmp.ne.s32.totalorder %s139, %s153
      %p155 = scmp.eq.s32.totalorder %s24, 0
      %p156 = por %p154, %p155
      %s158 = sadd.s32 %s157, 1
      %p161 = scmp.eq.s32.totalorder %s18, 1
      %p162 = scmp.ne.s32.totalorder %s157, %s159
      %p163 = scmp.eq.s32.totalorder %s18, 0
      %p164 = por %p162, %p163
      %p165 = scmp.ne.s32.totalorder %s157, %s159
      %p166 = scmp.eq.s32.totalorder %s23, 1
      %p167 = por %p165, %p166
      %p168 = scmp.ne.s32.totalorder %s159, %s160
      %p169 = scmp.eq.s32.totalorder %s23, 0
      %p170 = por %p168, %p169
      %p171 = scmp.ne.s32.totalorder %s159, %s160
      %p172 = scmp.eq.s32.totalorder %s24, 1
      %p173 = por %p171, %p172
      %p175 = scmp.ne.s32.totalorder %s160, %s174
      %p176 = scmp.eq.s32.totalorder %s24, 0
      %p177 = por %p175, %p176
      %s179 = sadd.s32 %s178, 1
      %p182 = scmp.eq.s32.totalorder %s18, 1
      %p183 = scmp.ne.s32.totalorder %s178, %s180
      %p184 = scmp.eq.s32.totalorder %s18, 0
      %p185 = por %p183, %p184
      %p186 = scmp.ne.s32.totalorder %s178, %s180
      %p187 = scmp.eq.s32.totalorder %s23, 1
      %p188 = por %p186, %p187
      %p189 = scmp.ne.s32.totalorder %s180, %s181
      %p190 = scmp.eq.s32.totalorder %s23, 0
      %p191 = por %p189, %p190
      %p192 = scmp.ne.s32.totalorder %s180, %s181
      %p193 = scmp.eq.s32.totalorder %s24, 1
      %p194 = por %p192, %p193
      %p196 = scmp.ne.s32.totalorder %s181, %s195
      %p197 = scmp.eq.s32.totalorder %s24, 0
      %p198 = por %p196, %p197
      %s200 = sadd.s32 %s199, 1
      %p203 = scmp.eq.s32.totalorder %s18, 1
      %p204 = scmp.ne.s32.totalorder %s199, %s201
      %p205 = scmp.eq.s32.totalorder %s18, 0
      %p206 = por %p204, %p205
      %p207 = scmp.ne.s32.totalorder %s199, %s201
      %p208 = scmp.eq.s32.totalorder %s23, 1
      %p209 = por %p207, %p208
      %p210 = scmp.ne.s32.totalorder %s201, %s202
      %p211 = scmp.eq.s32.totalorder %s23, 0
      %p212 = por %p210, %p211
      %p213 = scmp.ne.s32.totalorder %s201, %s202
      %p214 = scmp.eq.s32.totalorder %s24, 1
      %p215 = por %p213, %p214
      %p217 = scmp.ne.s32.totalorder %s202, %s216
      %p218 = scmp.eq.s32.totalorder %s24, 0
      %p219 = por %p217, %p218
      %s220 = ssub.s32 %s18, %s25
      %p221 = scmp.eq.s32.totalorder %s220, 0
      %s223 = sadd.s32 %s222, 1
      %s224 = scalar_select %p221, %s222, %s223
      %p227 = pneg %p221
      %p228 = scmp.eq.s32.totalorder %s18, 1
      %p229 = por %p227, %p228
      %p230 = scmp.ne.s32.totalorder %s222, %s225
      %p231 = scmp.eq.s32.totalorder %s18, 0
      %p232 = por %p230, %p231
      %p233 = scmp.ne.s32.totalorder %s222, %s225
      %p234 = scmp.eq.s32.totalorder %s23, 1
      %p235 = por %p233, %p234
      %p236 = scmp.ne.s32.totalorder %s225, %s226
      %p237 = scmp.eq.s32.totalorder %s23, 0
      %p238 = por %p236, %p237
      %p239 = scmp.ne.s32.totalorder %s225, %s226
      %p240 = scmp.eq.s32.totalorder %s24, 1
      %p241 = por %p239, %p240
      %p243 = scmp.ne.s32.totalorder %s226, %s242
      %p244 = scmp.eq.s32.totalorder %s24, 0
      %p245 = por %p243, %p244
      %p246 = scmp.le.s32.totalorder 1, %s18
      %p247 = scmp.lt.s32.totalorder %s18, 3
      %p248 = pnand %p246, %p247
      %p249 = pneg %p248
      // Predicated region
      $region9: #{tpu_custom_call.1} parent=5 // pred_check
        _
      $region10: #{tpu_custom_call.1} parent=5 // pred_check_branch
        %251 = sbr.rel (%p248) target = $region12
      $region11: #{tpu_custom_call.1} parent=5 // pred_region
        %s252 = ssub.s32 %s18, 1
        // Predicated region
        $region13: #{tpu_custom_call.1} parent=11 // pred_check
          %p253 = pneg %p65
        $region14: #{tpu_custom_call.1} parent=11 // pred_check_branch
          %255 = sbr.rel (%p253) target = $region16
        $region15: #{tpu_custom_call.1} parent=11 // pred_region
          _
        $region16: #{tpu_custom_call.1} parent=11 // pred_fallthru
          _
        // Predicated region
        $region17: #{tpu_custom_call.1} parent=11 // pred_check
          %p256 = pneg %p86
        $region18: #{tpu_custom_call.1} parent=11 // pred_check_branch
          %258 = sbr.rel (%p256) target = $region20
        $region19: #{tpu_custom_call.1} parent=11 // pred_region
          _
        $region20: #{tpu_custom_call.1} parent=11 // pred_fallthru
          _
        // Predicated region
        $region21: #{tpu_custom_call.1} parent=11 // pred_check
          %p259 = pneg %p107
        $region22: #{tpu_custom_call.1} parent=11 // pred_check_branch
          %261 = sbr.rel (%p259) target = $region24
        $region23: #{tpu_custom_call.1} parent=11 // pred_region
          _
        $region24: #{tpu_custom_call.1} parent=11 // pred_fallthru
          _
        // Predicated region
        $region25: #{tpu_custom_call.1} parent=11 // pred_check
          %p262 = pneg %p128
        $region26: #{tpu_custom_call.1} parent=11 // pred_check_branch
          %264 = sbr.rel (%p262) target = $region28
        $region27: #{tpu_custom_call.1} parent=11 // pred_region
          _
        $region28: #{tpu_custom_call.1} parent=11 // pred_fallthru
          _
        // Predicated region
        $region29: #{tpu_custom_call.1} parent=11 // pred_check
          %p265 = pneg %p149
        $region30: #{tpu_custom_call.1} parent=11 // pred_check_branch
          %267 = sbr.rel (%p265) target = $region32
        $region31: #{tpu_custom_call.1} parent=11 // pred_region
          _
        $region32: #{tpu_custom_call.1} parent=11 // pred_fallthru
          _
        // Predicated region
        $region33: #{tpu_custom_call.1} parent=11 // pred_check
          %p268 = pneg %p170
        $region34: #{tpu_custom_call.1} parent=11 // pred_check_branch
          %270 = sbr.rel (%p268) target = $region36
        $region35: #{tpu_custom_call.1} parent=11 // pred_region
          _
        $region36: #{tpu_custom_call.1} parent=11 // pred_fallthru
          _
        // Predicated region
        $region37: #{tpu_custom_call.1} parent=11 // pred_check
          %p271 = pneg %p191
        $region38: #{tpu_custom_call.1} parent=11 // pred_check_branch
          %273 = sbr.rel (%p271) target = $region40
        $region39: #{tpu_custom_call.1} parent=11 // pred_region
          _
        $region40: #{tpu_custom_call.1} parent=11 // pred_fallthru
          _
        // Predicated region
        $region41: #{tpu_custom_call.1} parent=11 // pred_check
          %p274 = pneg %p212
        $region42: #{tpu_custom_call.1} parent=11 // pred_check_branch
          %276 = sbr.rel (%p274) target = $region44
        $region43: #{tpu_custom_call.1} parent=11 // pred_region
          _
        $region44: #{tpu_custom_call.1} parent=11 // pred_fallthru
          _
      $region12: #{tpu_custom_call.1} parent=5 // pred_fallthru
        _
      %p277 = scmp.lt.s32.totalorder %s18, 2
      // Predicated region
      $region45: #{tpu_custom_call.1} parent=5 // pred_check
        %p278 = pneg %p277
      $region46: #{tpu_custom_call.1} parent=5 // pred_check_branch
        %280 = sbr.rel (%p278) target = $region48
      $region47: #{tpu_custom_call.1} parent=5 // pred_region
        // Predicated region
        $region49: #{tpu_custom_call.1} parent=47 // pred_check
          %p281 = pneg %p38
        $region50: #{tpu_custom_call.1} parent=47 // pred_check_branch
          %283 = sbr.rel (%p281) target = $region52
        $region51: #{tpu_custom_call.1} parent=47 // pred_region
          %p284 = scmp.lt.s32.totalorder %s18, 1
          %s285 = scalar_select %p284, %s18, 1
          %s286 = smul.addr %s285, 2
          %s287 = smul.addr %s286, 4
          %s288 = scalar_lea.vmem %s0, %s287
        $region52: #{tpu_custom_call.1} parent=47 // pred_fallthru
          _
      $region48: #{tpu_custom_call.1} parent=5 // pred_fallthru
        _
      %p289 = scmp.le.s32.totalorder 1, %s18
      %p290 = scmp.lt.s32.totalorder %s18, 3
      %p291 = pnand %p289, %p290
      %p292 = pneg %p291
      // Predicated region
      $region53: #{tpu_custom_call.1} parent=5 // pred_check
        _
      $region54: #{tpu_custom_call.1} parent=5 // pred_check_branch
        %294 = sbr.rel (%p291) target = $region56
      $region55: #{tpu_custom_call.1} parent=5 // pred_region
        %s295 = ssub.s32 %s18, 1
        %p296 = scmp.lt.s32.totalorder %s23, 1
        %s297 = scalar_select %p296, %s23, 1
        %s298 = smul.addr %s297, 2
        %s299 = smul.addr %s298, 4
        %s300 = scalar_lea.vmem %s0, %s299
        %p301 = pneg %p44
        %p302 = pneg %p41
        %p303 = pneg %p65
        %p304 = pneg %p62
        %p305 = pneg %p86
        %p306 = pneg %p83
        %p307 = pneg %p107
        %p308 = pneg %p104
        %p309 = pneg %p128
        %p310 = pneg %p125
        %p311 = pneg %p149
        %p312 = pneg %p146
        %p313 = pneg %p170
        %p314 = pneg %p167
        %p315 = pneg %p191
        %p316 = pneg %p188
        %p317 = pneg %p212
        %p318 = pneg %p209
        %p319 = pneg %p238
        %p320 = pneg %p235
        %s321 = sand.u32 %s225, 1
        %s322 = scalar_lea.sflag [#allocation3], %s321
        %s323 = sand.u32 %s225, 1
        %s324 = smul.addr %s323, 8
        %s325 = scalar_lea.vmem [#allocation2], %s324
        %p326 = scmp.lt.s32.totalorder %s23, 1
        %s327 = scalar_select %p326, %s23, 1
        %s328 = smul.addr %s327, 2
        %s329 = smul.addr %s328, 4
        %s330 = scalar_lea.vmem %s0, %s329
        %v331 = vld [vmem:[%s330] sm:$0xff]
        %v332 = vld [vmem:[%s1] sm:$0xff]
        %v333 = vld [vmem:[%s1 + $0x8] sm:$0xff]
        %v334 = vld [vmem:[%s1 + $0x10] sm:$0xff]
        %v335 = vld [vmem:[%s1 + $0x18] sm:$0xff]
        %v336 = vld [vmem:[%s1 + $0x20] sm:$0xff]
        %v337 = vld [vmem:[%s1 + $0x28] sm:$0xff]
        %v338 = vld [vmem:[%s1 + $0x30] sm:$0xff]
        %v339 = vld [vmem:[%s1 + $0x38] sm:$0xff]
        %v340 = vld [vmem:[%s1 + $0x40] sm:$0xff]
        %v341 = vld [vmem:[%s1 + $0x48] sm:$0xff]
        %v342 = vld [vmem:[%s1 + $0x50] sm:$0xff]
        %v343 = vld [vmem:[%s1 + $0x58] sm:$0xff]
        %v344 = vld [vmem:[%s1 + $0x60] sm:$0xff]
        %v345 = vld [vmem:[%s1 + $0x68] sm:$0xff]
        %v346 = vld [vmem:[%s1 + $0x70] sm:$0xff]
        %v347 = vld [vmem:[%s1 + $0x78] sm:$0xff]
        %v348 = vld [vmem:[%s1 + $0x80] sm:$0xff]
        %v349 = vld [vmem:[%s1 + $0x88] sm:$0xff]
        %v350 = vld [vmem:[%s1 + $0x90] sm:$0xff]
        %v351 = vld [vmem:[%s1 + $0x98] sm:$0xff]
        %v352 = vld [vmem:[%s1 + $0xa0] sm:$0xff]
        %v353 = vld [vmem:[%s1 + $0xa8] sm:$0xff]
        %v354 = vld [vmem:[%s1 + $0xb0] sm:$0xff]
        %v355 = vld [vmem:[%s1 + $0xb8] sm:$0xff]
        %v356 = vld [vmem:[%s1 + $0xc0] sm:$0xff]
        %v357 = vld [vmem:[%s1 + $0xc8] sm:$0xff]
        %v358 = vld [vmem:[%s1 + $0xd0] sm:$0xff]
        %v359 = vld [vmem:[%s1 + $0xd8] sm:$0xff]
        %v360 = vld [vmem:[%s1 + $0xe0] sm:$0xff]
        %v361 = vld [vmem:[%s1 + $0xe8] sm:$0xff]
        %v362 = vld [vmem:[%s1 + $0xf0] sm:$0xff]
        %v363 = vld [vmem:[%s1 + $0xf8] sm:$0xff]
        %v365 = vcombine.high %v331, %v331
        %367 = vmatprep.subr.mxu0 0.0
        %368 = vmatpush1.msra.mxu0 %v332
        %369 = vmatprep.subr.mxu0 0.0
        %370 = vmatpush1.msra.mxu0 %v333
        %371 = vmatprep.subr.mxu0 0.0
        %372 = vmatpush1.msra.mxu0 %v334
        %373 = vmatprep.subr.mxu0 0.0
        %374 = vmatpush1.msra.mxu0 %v335
        %375 = vmatprep.subr.mxu0 0.0
        %376 = vmatpush1.msra.mxu0 %v336
        %377 = vmatprep.subr.mxu0 0.0
        %378 = vmatpush1.msra.mxu0 %v337
        %379 = vmatprep.subr.mxu0 0.0
        %380 = vmatpush1.msra.mxu0 %v338
        %381 = vmatprep.subr.mxu0 0.0
        %382 = vmatpush1.msra.mxu0 %v339
        %383 = vmatprep.subr.mxu0 0.0
        %384 = vmatpush1.msra.mxu0 %v340
        %385 = vmatprep.subr.mxu0 0.0
        %386 = vmatpush1.msra.mxu0 %v341
        %387 = vmatprep.subr.mxu0 0.0
        %388 = vmatpush1.msra.mxu0 %v342
        %389 = vmatprep.subr.mxu0 0.0
        %390 = vmatpush1.msra.mxu0 %v343
        %391 = vmatprep.subr.mxu0 0.0
        %392 = vmatpush1.msra.mxu0 %v344
        %393 = vmatprep.subr.mxu0 0.0
        %394 = vmatpush1.msra.mxu0 %v345
        %395 = vmatprep.subr.mxu0 0.0
        %396 = vmatpush1.msra.mxu0 %v346
        %397 = vmatprep.subr.mxu0 0.0
        %398 = vmatpush1.msra.mxu0 %v347
        %399 = vmatprep.subr.mxu0 0.0
        %400 = vmatpush1.msra.mxu0 %v348
        %401 = vmatprep.subr.mxu0 0.0
        %402 = vmatpush1.msra.mxu0 %v349
        %403 = vmatprep.subr.mxu0 0.0
        %404 = vmatpush1.msra.mxu0 %v350
        %405 = vmatprep.subr.mxu0 0.0
        %406 = vmatpush1.msra.mxu0 %v351
        %407 = vmatprep.subr.mxu0 0.0
        %408 = vmatpush1.msra.mxu0 %v352
        %409 = vmatprep.subr.mxu0 0.0
        %410 = vmatpush1.msra.mxu0 %v353
        %411 = vmatprep.subr.mxu0 0.0
        %412 = vmatpush1.msra.mxu0 %v354
        %413 = vmatprep.subr.mxu0 0.0
        %414 = vmatpush1.msra.mxu0 %v355
        %415 = vmatprep.subr.mxu0 0.0
        %416 = vmatpush1.msra.mxu0 %v356
        %417 = vmatprep.subr.mxu0 0.0
        %418 = vmatpush1.msra.mxu0 %v357
        %419 = vmatprep.subr.mxu0 0.0
        %420 = vmatpush1.msra.mxu0 %v358
        %421 = vmatprep.subr.mxu0 0.0
        %422 = vmatpush1.msra.mxu0 %v359
        %423 = vmatprep.subr.mxu0 0.0
        %424 = vmatpush1.msra.mxu0 %v360
        %425 = vmatprep.subr.mxu0 0.0
        %426 = vmatpush1.msra.mxu0 %v361
        %427 = vmatprep.subr.mxu0 0.0
        %428 = vmatpush1.msra.mxu0 %v362
        %429 = vmatprep.subr.mxu0 0.0
        %430 = vmatpush1.msra.mxu0 %v363
        %431 = vmatprep.mubr.f32.mxu0 %v365
        %432 = vmatmul.mubr.f32.gmra.mrb[0].mxu0 %v331
        %v433 = vpop.f32.mrb[0].mxu0
        %v434 = vadd.f32 0.0, %v433
        %v435 = vpop.f32.mrb[0].mxu0
        %436 = vdwg.mxu0
        %v437 = vmul.f32 %v434, 0.0625
        %v438 = vld [vmem:[%s2] sm:$0xff]
        %v439 = vld [vmem:[%s3] sm:$0xff]
        %441 = vset.pattern.permute.xlu0 0
        %442 = vperm.xlu0 %441, %v439
        %v443 = vpop.permute.xlu0 %442
        %vm445 = vcmask 31744
        %v447 = vsel %vm445, %v438, 0
        %vm449 = vcmask 1043456
        %v451 = vsel %vm449, %v437, 0
        %453 = vmatprep.subr.mxu0 0.0
        %454 = vmatpush1.msra.mxu0 %v451
        %455 = vmatprep.subr.mxu0 0.0
        %456 = vmatpush1.msra.mxu0 0.0
        %457 = vmatprep.subr.mxu0 0.0
        %458 = vmatpush1.msra.mxu0 0.0
        %459 = vmatprep.subr.mxu0 0.0
        %460 = vmatpush1.msra.mxu0 0.0
        %461 = vmatprep.subr.mxu0 0.0
        %462 = vmatpush1.msra.mxu0 0.0
        %463 = vmatprep.subr.mxu0 0.0
        %464 = vmatpush1.msra.mxu0 0.0
        %465 = vmatprep.subr.mxu0 0.0
        %466 = vmatpush1.msra.mxu0 0.0
        %467 = vmatprep.subr.mxu0 0.0
        %468 = vmatpush1.msra.mxu0 0.0
        %469 = vmatprep.subr.mxu0 0.0
        %470 = vmatpush1.msra.mxu0 0.0
        %471 = vmatprep.subr.mxu0 0.0
        %472 = vmatpush1.msra.mxu0 0.0
        %473 = vmatprep.subr.mxu0 0.0
        %474 = vmatpush1.msra.mxu0 0.0
        %475 = vmatprep.subr.mxu0 0.0
        %476 = vmatpush1.msra.mxu0 0.0
        %477 = vmatprep.subr.mxu0 0.0
        %478 = vmatpush1.msra.mxu0 0.0
        %479 = vmatprep.subr.mxu0 0.0
        %480 = vmatpush1.msra.mxu0 0.0
        %481 = vmatprep.subr.mxu0 0.0
        %482 = vmatpush1.msra.mxu0 0.0
        %483 = vmatprep.subr.mxu0 0.0
        %484 = vmatpush1.msra.mxu0 0.0
        %485 = vmatprep.subr.mxu0 0.0
        %486 = vmatpush1.msra.mxu0 0.0
        %487 = vmatprep.subr.mxu0 0.0
        %488 = vmatpush1.msra.mxu0 0.0
        %489 = vmatprep.subr.mxu0 0.0
        %490 = vmatpush1.msra.mxu0 0.0
        %491 = vmatprep.subr.mxu0 0.0
        %492 = vmatpush1.msra.mxu0 0.0
        %493 = vmatprep.subr.mxu0 0.0
        %494 = vmatpush1.msra.mxu0 0.0
        %495 = vmatprep.subr.mxu0 0.0
        %496 = vmatpush1.msra.mxu0 0.0
        %497 = vmatprep.subr.mxu0 0.0
        %498 = vmatpush1.msra.mxu0 0.0
        %499 = vmatprep.subr.mxu0 0.0
        %500 = vmatpush1.msra.mxu0 0.0
        %501 = vmatprep.subr.mxu0 0.0
        %502 = vmatpush1.msra.mxu0 0.0
        %503 = vmatprep.subr.mxu0 0.0
        %504 = vmatpush1.msra.mxu0 0.0
        %505 = vmatprep.subr.mxu0 0.0
        %506 = vmatpush1.msra.mxu0 0.0
        %507 = vmatprep.subr.mxu0 0.0
        %508 = vmatpush1.msra.mxu0 0.0
        %509 = vmatprep.subr.mxu0 0.0
        %510 = vmatpush1.msra.mxu0 0.0
        %511 = vmatprep.subr.mxu0 0.0
        %512 = vmatpush1.msra.mxu0 0.0
        %513 = vmatprep.subr.mxu0 0.0
        %514 = vmatpush1.msra.mxu0 0.0
        %515 = vmatprep.subr.mxu0 0.0
        %516 = vmatpush1.msra.mxu0 0.0
        %517 = vmatprep.mubr.f32.mxu0 0.0
        %518 = vmatmul.mubr.f32.gmra.mrb[0].mxu0 %v447
        %v519 = vpop.f32.mrb[0].mxu0
        %v520 = vadd.f32 %v443, %v519
        %v521 = vpop.f32.mrb[0].mxu0
        %522 = vdwg.mxu0
        %v523 = vadd.f32 %v520, 3.0
        %v524 = vmax.f32 %v523, 0.0
        %v525 = vmin.f32 %v524, 6.0
        %v526 = vmul.f32 %v525, 0.16666667
        %v527 = vmul.f32 %v520, %v526
        %v528 = vld [vmem:[%s4] sm:$0xff]
        %vm529 = vcmask 64512
        %v531 = vsel %vm529, %v528, 0
        %533 = vmatprep.subr.mxu0 0.0
        %534 = vmatpush1.msra.mxu0 %v527
        %535 = vmatprep.subr.mxu0 0.0
        %536 = vmatpush1.msra.mxu0 0.0
        %537 = vmatprep.subr.mxu0 0.0
        %538 = vmatpush1.msra.mxu0 0.0
        %539 = vmatprep.subr.mxu0 0.0
        %540 = vmatpush1.msra.mxu0 0.0
        %541 = vmatprep.subr.mxu0 0.0
        %542 = vmatpush1.msra.mxu0 0.0
        %543 = vmatprep.subr.mxu0 0.0
        %544 = vmatpush1.msra.mxu0 0.0
        %545 = vmatprep.subr.mxu0 0.0
        %546 = vmatpush1.msra.mxu0 0.0
        %547 = vmatprep.subr.mxu0 0.0
        %548 = vmatpush1.msra.mxu0 0.0
        %549 = vmatprep.subr.mxu0 0.0
        %550 = vmatpush1.msra.mxu0 0.0
        %551 = vmatprep.subr.mxu0 0.0
        %552 = vmatpush1.msra.mxu0 0.0
        %553 = vmatprep.subr.mxu0 0.0
        %554 = vmatpush1.msra.mxu0 0.0
        %555 = vmatprep.subr.mxu0 0.0
        %556 = vmatpush1.msra.mxu0 0.0
        %557 = vmatprep.subr.mxu0 0.0
        %558 = vmatpush1.msra.mxu0 0.0
        %559 = vmatprep.subr.mxu0 0.0
        %560 = vmatpush1.msra.mxu0 0.0
        %561 = vmatprep.subr.mxu0 0.0
        %562 = vmatpush1.msra.mxu0 0.0
        %563 = vmatprep.subr.mxu0 0.0
        %564 = vmatpush1.msra.mxu0 0.0
        %565 = vmatprep.subr.mxu0 0.0
        %566 = vmatpush1.msra.mxu0 0.0
        %567 = vmatprep.subr.mxu0 0.0
        %568 = vmatpush1.msra.mxu0 0.0
        %569 = vmatprep.subr.mxu0 0.0
        %570 = vmatpush1.msra.mxu0 0.0
        %571 = vmatprep.subr.mxu0 0.0
        %572 = vmatpush1.msra.mxu0 0.0
        %573 = vmatprep.subr.mxu0 0.0
        %574 = vmatpush1.msra.mxu0 0.0
        %575 = vmatprep.subr.mxu0 0.0
        %576 = vmatpush1.msra.mxu0 0.0
        %577 = vmatprep.subr.mxu0 0.0
        %578 = vmatpush1.msra.mxu0 0.0
        %579 = vmatprep.subr.mxu0 0.0
        %580 = vmatpush1.msra.mxu0 0.0
        %581 = vmatprep.subr.mxu0 0.0
        %582 = vmatpush1.msra.mxu0 0.0
        %583 = vmatprep.subr.mxu0 0.0
        %584 = vmatpush1.msra.mxu0 0.0
        %585 = vmatprep.subr.mxu0 0.0
        %586 = vmatpush1.msra.mxu0 0.0
        %587 = vmatprep.subr.mxu0 0.0
        %588 = vmatpush1.msra.mxu0 0.0
        %589 = vmatprep.subr.mxu0 0.0
        %590 = vmatpush1.msra.mxu0 0.0
        %591 = vmatprep.subr.mxu0 0.0
        %592 = vmatpush1.msra.mxu0 0.0
        %593 = vmatprep.subr.mxu0 0.0
        %594 = vmatpush1.msra.mxu0 0.0
        %595 = vmatprep.subr.mxu0 0.0
        %596 = vmatpush1.msra.mxu0 0.0
        %597 = vmatprep.mubr.f32.mxu0 0.0
        %598 = vmatmul.mubr.f32.gmra.mrb[0].mxu0 %v531
        %v599 = vpop.f32.mrb[0].mxu0
        %v600 = vadd.f32 0.0, %v599
        %v601 = vpop.f32.mrb[0].mxu0
        %602 = vdwg.mxu0
        %v603 = vld [vmem:[%s5] sm:$0xf]
        %605 = vset.pattern.permute.xlu0 0
        %606 = vperm.xlu0 %605, %v603
        %v607 = vpop.permute.xlu0 %606
        %v609 = vadd.f32 %v600, %v607
        %v610 = vxor.u32 %v609, 2147483648
        %v611 = vmul.f32 %v610, 1.442695
        %v612 = vpow.pop %v611
        %v613 = vadd.f32 %v612, 1.0
        %v614 = vrcp.pop %v613
        %v615 = vmul.f32 1.0, %v614
        %v616 = vld [vmem:[%s6] sm:$0xf]
        %618 = vset.pattern.permute.xlu0 0
        %619 = vperm.xlu0 %618, %v616
        %v620 = vpop.permute.xlu0 %619
        %v621 = vrot.slane %v620, 4
        %v623 = vadd.f32 %v600, %v621
        %v624 = vxor.u32 %v623, 2147483648
        %v625 = vmul.f32 %v624, 1.442695
        %v626 = vpow.pop %v625
        %v627 = vadd.f32 %v626, 1.0
        %v628 = vrcp.pop %v627
        %v629 = vmul.f32 1.0, %v628
        %v630 = vld [vmem:[%s7] sm:$0xff]
        %v631 = vld [vmem:[%s7 + $0x8] sm:$0xff]
        %v632 = vld [vmem:[%s7 + $0x10] sm:$0xff]
        %v633 = vld [vmem:[%s7 + $0x18] sm:$0xff]
        %vm634 = vcmask 130048
        %v636 = vsel %vm634, %v615, 0
        %638 = vmatprep.subr.mxu0 %v631
        %639 = vmatpush1.msra.mxu0 %v630
        %640 = vmatprep.subr.mxu0 %v633
        %641 = vmatpush1.msra.mxu0 %v632
        %642 = vmatprep.subr.mxu0 0.0
        %643 = vmatpush1.msra.mxu0 0.0
        %644 = vmatprep.subr.mxu0 0.0
        %645 = vmatpush1.msra.mxu0 0.0
        %646 = vmatprep.subr.mxu0 0.0
        %647 = vmatpush1.msra.mxu0 0.0
        %648 = vmatprep.subr.mxu0 0.0
        %649 = vmatpush1.msra.mxu0 0.0
        %650 = vmatprep.subr.mxu0 0.0
        %651 = vmatpush1.msra.mxu0 0.0
        %652 = vmatprep.subr.mxu0 0.0
        %653 = vmatpush1.msra.mxu0 0.0
        %654 = vmatprep.subr.mxu0 0.0
        %655 = vmatpush1.msra.mxu0 0.0
        %656 = vmatprep.subr.mxu0 0.0
        %657 = vmatpush1.msra.mxu0 0.0
        %658 = vmatprep.subr.mxu0 0.0
        %659 = vmatpush1.msra.mxu0 0.0
        %660 = vmatprep.subr.mxu0 0.0
        %661 = vmatpush1.msra.mxu0 0.0
        %662 = vmatprep.subr.mxu0 0.0
        %663 = vmatpush1.msra.mxu0 0.0
        %664 = vmatprep.subr.mxu0 0.0
        %665 = vmatpush1.msra.mxu0 0.0
        %666 = vmatprep.subr.mxu0 0.0
        %667 = vmatpush1.msra.mxu0 0.0
        %668 = vmatprep.subr.mxu0 0.0
        %669 = vmatpush1.msra.mxu0 0.0
        %670 = vmatprep.subr.mxu0 0.0
        %671 = vmatpush1.msra.mxu0 0.0
        %672 = vmatprep.subr.mxu0 0.0
        %673 = vmatpush1.msra.mxu0 0.0
        %674 = vmatprep.subr.mxu0 0.0
        %675 = vmatpush1.msra.mxu0 0.0
        %676 = vmatprep.subr.mxu0 0.0
        %677 = vmatpush1.msra.mxu0 0.0
        %678 = vmatprep.subr.mxu0 0.0
        %679 = vmatpush1.msra.mxu0 0.0
        %680 = vmatprep.subr.mxu0 0.0
        %681 = vmatpush1.msra.mxu0 0.0
        %682 = vmatprep.subr.mxu0 0.0
        %683 = vmatpush1.msra.mxu0 0.0
        %684 = vmatprep.subr.mxu0 0.0
        %685 = vmatpush1.msra.mxu0 0.0
        %686 = vmatprep.subr.mxu0 0.0
        %687 = vmatpush1.msra.mxu0 0.0
        %688 = vmatprep.subr.mxu0 0.0
        %689 = vmatpush1.msra.mxu0 0.0
        %690 = vmatprep.subr.mxu0 0.0
        %691 = vmatpush1.msra.mxu0 0.0
        %692 = vmatprep.subr.mxu0 0.0
        %693 = vmatpush1.msra.mxu0 0.0
        %694 = vmatprep.subr.mxu0 0.0
        %695 = vmatpush1.msra.mxu0 0.0
        %696 = vmatprep.subr.mxu0 0.0
        %697 = vmatpush1.msra.mxu0 0.0
        %698 = vmatprep.subr.mxu0 0.0
        %699 = vmatpush1.msra.mxu0 0.0
        %700 = vmatprep.subr.mxu0 0.0
        %701 = vmatpush1.msra.mxu0 0.0
        %702 = vmatprep.mubr.f32.mxu0 0.0
        %703 = vmatmul.mubr.f32.gmra.mrb[0].mxu0 %v636
        %v704 = vpop.f32.mrb[0].mxu0
        %v705 = vadd.f32 0.0, %v704
        %v706 = vpop.f32.mrb[0].mxu0
        %v707 = vadd.f32 0.0, %v706
        %708 = vdwg.mxu0
        %v709 = vld [vmem:[%s8] sm:$0xff]
        %v710 = vld [vmem:[%s8 + $0x8] sm:$0xff]
        %v711 = vld [vmem:[%s8 + $0x10] sm:$0xff]
        %v712 = vld [vmem:[%s8 + $0x18] sm:$0xff]
        %v714 = vrot.slane %v629, 4
        %715 = vrot.lane.b32.xlu0 %v714, 112
        %v716 = vpop.permute.xlu0 %715
        %v717 = vsel %vm634, %v716, 0
        %719 = vmatprep.subr.mxu0 %v710
        %720 = vmatpush1.msra.mxu0 %v709
        %721 = vmatprep.subr.mxu0 %v712
        %722 = vmatpush1.msra.mxu0 %v711
        %723 = vmatprep.subr.mxu0 0.0
        %724 = vmatpush1.msra.mxu0 0.0
        %725 = vmatprep.subr.mxu0 0.0
        %726 = vmatpush1.msra.mxu0 0.0
        %727 = vmatprep.subr.mxu0 0.0
        %728 = vmatpush1.msra.mxu0 0.0
        %729 = vmatprep.subr.mxu0 0.0
        %730 = vmatpush1.msra.mxu0 0.0
        %731 = vmatprep.subr.mxu0 0.0
        %732 = vmatpush1.msra.mxu0 0.0
        %733 = vmatprep.subr.mxu0 0.0
        %734 = vmatpush1.msra.mxu0 0.0
        %735 = vmatprep.subr.mxu0 0.0
        %736 = vmatpush1.msra.mxu0 0.0
        %737 = vmatprep.subr.mxu0 0.0
        %738 = vmatpush1.msra.mxu0 0.0
        %739 = vmatprep.subr.mxu0 0.0
        %740 = vmatpush1.msra.mxu0 0.0
        %741 = vmatprep.subr.mxu0 0.0
        %742 = vmatpush1.msra.mxu0 0.0
        %743 = vmatprep.subr.mxu0 0.0
        %744 = vmatpush1.msra.mxu0 0.0
        %745 = vmatprep.subr.mxu0 0.0
        %746 = vmatpush1.msra.mxu0 0.0
        %747 = vmatprep.subr.mxu0 0.0
        %748 = vmatpush1.msra.mxu0 0.0
        %749 = vmatprep.subr.mxu0 0.0
        %750 = vmatpush1.msra.mxu0 0.0
        %751 = vmatprep.subr.mxu0 0.0
        %752 = vmatpush1.msra.mxu0 0.0
        %753 = vmatprep.subr.mxu0 0.0
        %754 = vmatpush1.msra.mxu0 0.0
        %755 = vmatprep.subr.mxu0 0.0
        %756 = vmatpush1.msra.mxu0 0.0
        %757 = vmatprep.subr.mxu0 0.0
        %758 = vmatpush1.msra.mxu0 0.0
        %759 = vmatprep.subr.mxu0 0.0
        %760 = vmatpush1.msra.mxu0 0.0
        %761 = vmatprep.subr.mxu0 0.0
        %762 = vmatpush1.msra.mxu0 0.0
        %763 = vmatprep.subr.mxu0 0.0
        %764 = vmatpush1.msra.mxu0 0.0
        %765 = vmatprep.subr.mxu0 0.0
        %766 = vmatpush1.msra.mxu0 0.0
        %767 = vmatprep.subr.mxu0 0.0
        %768 = vmatpush1.msra.mxu0 0.0
        %769 = vmatprep.subr.mxu0 0.0
        %770 = vmatpush1.msra.mxu0 0.0
        %771 = vmatprep.subr.mxu0 0.0
        %772 = vmatpush1.msra.mxu0 0.0
        %773 = vmatprep.subr.mxu0 0.0
        %774 = vmatpush1.msra.mxu0 0.0
        %775 = vmatprep.subr.mxu0 0.0
        %776 = vmatpush1.msra.mxu0 0.0
        %777 = vmatprep.subr.mxu0 0.0
        %778 = vmatpush1.msra.mxu0 0.0
        %779 = vmatprep.subr.mxu0 0.0
        %780 = vmatpush1.msra.mxu0 0.0
        %781 = vmatprep.subr.mxu0 0.0
        %782 = vmatpush1.msra.mxu0 0.0
        %783 = vmatprep.mubr.f32.mxu0 0.0
        %784 = vmatmul.mubr.f32.gmra.mrb[0].mxu0 %v717
        %v785 = vpop.f32.mrb[0].mxu0
        %v786 = vadd.f32 0.0, %v785
        %v787 = vpop.f32.mrb[0].mxu0
        %v788 = vadd.f32 0.0, %v787
        %789 = vdwg.mxu0
        %v792 = vcombine.low %v705, %v707
        %v794 = vmul.f32 %v331, %v792
        %v797 = vcombine.low %v786, %v788
        %v799 = vmul.f32 %v794, %v797
        %800 = vst [vmem:[%s325] sm:$0xff] %v799
        %s801 = sand.u32 %s225, 1
        %s802 = scalar_lea.sflag [#allocation3], %s801
        %s803 = sand.u32 %s225, 1
        %s804 = smul.addr %s803, 8
        %s805 = scalar_lea.vmem [#allocation2], %s804
        // Predicated region
        $region57: #{tpu_custom_call.1} parent=55 // pred_check
          %p806 = pneg %p235
        $region58: #{tpu_custom_call.1} parent=55 // pred_check_branch
          %808 = sbr.rel (%p806) target = $region60
        $region59: #{tpu_custom_call.1} parent=55 // pred_region
          %s810 = ssub.s32 128, 128
          %811 = vsyncadd %s802, %s810
          %s812 = smul.addr %s23, 2
          %s813 = smul.addr %s812, 64
          %s814 = scalar_lea.hbm %s9, %s813
          %s816 = sshll.u32 %s805, 4
          %s817 = int_to_ptr.vmem [resolvable:$true] %s816
          %819 = dma.vmem_to_hbm [thread:$0]  %s817, 128, %s814, %s802
        $region60: #{tpu_custom_call.1} parent=55 // pred_fallthru
          _
      $region56: #{tpu_custom_call.1} parent=5 // pred_fallthru
        _
      %p820 = scmp.le.s32.totalorder 2, %s18
      // Predicated region
      $region61: #{tpu_custom_call.1} parent=5 // pred_check
        %p821 = pneg %p820
      $region62: #{tpu_custom_call.1} parent=5 // pred_check_branch
        %823 = sbr.rel (%p821) target = $region64
      $region63: #{tpu_custom_call.1} parent=5 // pred_region
        %s824 = ssub.s32 %s18, 2
        // Predicated region
        $region65: #{tpu_custom_call.1} parent=63 // pred_check
          %p825 = pneg %p241
        $region66: #{tpu_custom_call.1} parent=63 // pred_check_branch
          %827 = sbr.rel (%p825) target = $region68
        $region67: #{tpu_custom_call.1} parent=63 // pred_region
          %s828 = sand.u32 %s226, 1
          %s829 = scalar_lea.sflag [#allocation3], %s828
          %s830 = sand.u32 %s226, 1
          %s831 = smul.addr %s830, 8
          %s832 = scalar_lea.vmem [#allocation2], %s831
          %833 = dma.done %s829, 128
        $region68: #{tpu_custom_call.1} parent=63 // pred_fallthru
          _
      $region64: #{tpu_custom_call.1} parent=5 // pred_fallthru
        _
    $region6: #{tpu_custom_call.1} parent=1 // loop_footer
      %s22 = sadd.s32 1, %s18
    $region7: #{tpu_custom_call.1} parent=1 // loop_footer_branch
      %17 = sbr.rel target = $region3
    $region8: #{tpu_custom_call.1} parent=1 // loop_exit
      _
    %834 = vsyncpa [#allocation3], 1
    %s835 = scalar_lea.sflag [#allocation3], 1
    %836 = vsyncpa %s835, 1

</llo_original>
